<compile_context>
chip_gen: v5e
topology: v5e:2x2
jax: 0.10.0
libtpu: 0.0.40
codegen_flags: <defaults>
</compile_context>

<pallas_src>
import jax
import jax.numpy as jnp
from jax.experimental import pallas as pl
from jax.experimental.pallas import tpu as pltpu

NEG_INF = -jnp.inf  # yoyodyne defaults.NEG_INF


def attention_kernel(enc_flat_ref, hid_ref, mask_ref, we_ref, wh_ref, mb_ref,
                     v_ref, sel_bbs_ref, sel_bsb_ref, eye_ref,
                     weighted_ref, weights_ref):
    """Masked concat attention for the whole (small) batch in one invocation.

    enc_flat_ref : (B*S, E)  encoder outputs, batch/seq rows flattened (wrapper reshape)
    hid_ref      : (B, H)    last decoder hidden state
    mask_ref     : (B, S)    int32, 1 = masked
    we_ref       : (E, H)    encoder part of M.weight (transposed)
    wh_ref       : (H, H)    hidden part of M.weight (transposed)
    mb_ref       : (1, H)    M.bias
    v_ref        : (1, H)    V.weight row (V.bias dropped: cancels in softmax)
    sel_bbs_ref  : (B, B*S)  one-hot: 1 iff column r belongs to batch row b
    sel_bsb_ref  : (B*S, B)  transpose of the above (row r -> its batch)
    eye_ref      : (B*S, S)  one-hot: 1 iff row r has sequence position s
    weighted_ref : (B, E)    out: weighted sum of encoder states
    weights_ref  : (B, S)    out: attention weights (lane-dense)
    """
    B, S = mask_ref.shape

    enc_flat = enc_flat_ref[...]                                        # (B*S, E)
    sel_bbs = sel_bbs_ref[...]                                          # (B, B*S)

    # ---- batched projections: one MXU matmul each, no per-batch loop ----
    # hidden projection computed once at (B, H); M.bias folded in here.
    hid_proj = (jnp.dot(hid_ref[...], wh_ref[...],
                        preferred_element_type=jnp.float32)
                + mb_ref[...])                                          # (B, H)
    # broadcast each batch's hidden projection to its S flattened rows via a
    # one-hot matmul (keeps everything 2-D; no in-kernel reshapes/relayouts).
    hid_rows = jnp.dot(sel_bsb_ref[...], hid_proj,
                       preferred_element_type=jnp.float32)              # (B*S, H)
    m_flat = jnp.dot(enc_flat, we_ref[...],
                     preferred_element_type=jnp.float32) + hid_rows     # (B*S, H)

    # ---- V projection as VPU multiply + lane reduce (no width-1 matmul).
    # V.bias omitted: a constant score shift cancels exactly in softmax. ----
    g = jnp.sum(jnp.tanh(m_flat) * v_ref[...],
                axis=-1, keepdims=True)                                 # (B*S, 1)

    # ---- fold flat per-row scores into lane-dense (B, S):
    # scores[b, s] = g[b*S + s]  (exact: one-hot selection matrices). ----
    scores = jnp.dot(sel_bbs, g * eye_ref[...],
                     preferred_element_type=jnp.float32)                # (B, S)

    # ---- masked_fill + softmax over the sequence axis (lanes) ----
    scores = jnp.where(mask_ref[...] != 0, NEG_INF, scores)
    s_max = jnp.max(scores, axis=-1, keepdims=True)                     # (B, 1)
    e = jnp.exp(scores - s_max)                                         # (B, S)
    den = jnp.sum(e, axis=-1, keepdims=True)                            # (B, 1)
    inv = pl.reciprocal(den, approx=True)                               # EUP slot
    inv = inv * (2.0 - den * inv)        # one Newton step -> f32-accurate 1/den
    w = e * inv                                                         # (B, S)

    # ---- weighted sum of encoder states as ONE (B, B*S) @ (B*S, E) matmul:
    # block-diagonal weight matrix = (weights tiled along lanes) * one-hot. ----
    w_bd = jnp.concatenate([w] * B, axis=1) * sel_bbs                   # (B, B*S)
    weighted = jnp.dot(w_bd, enc_flat,
                       preferred_element_type=jnp.float32)              # (B, E)

    # single full-block stores (lane-dense outputs, no masked column writes)
    weights_ref[...] = w
    weighted_ref[...] = weighted


@jax.jit
def attention_pallas(hidden, encoder_outputs, mask, we, wh, mb, v_row):
    B, S, E = encoder_outputs.shape
    H = wh.shape[0]
    BS = B * S

    # All reshapes / constant one-hot matrices are built on the XLA side.
    enc_flat = encoder_outputs.reshape(BS, E)                 # (B*S, E)
    hid_last = hidden[:, -1, :]                               # (B, H)
    mask_i32 = mask.astype(jnp.int32)                         # (B, S)

    batch_of_row = jnp.repeat(jnp.arange(B, dtype=jnp.int32), S)       # (BS,)
    seq_of_row = jnp.tile(jnp.arange(S, dtype=jnp.int32), B)           # (BS,)
    sel_bbs = (batch_of_row[None, :] ==
               jnp.arange(B, dtype=jnp.int32)[:, None]).astype(jnp.float32)   # (B, BS)
    sel_bsb = sel_bbs.T                                                        # (BS, B)
    eye_bss = (seq_of_row[:, None] ==
               jnp.arange(S, dtype=jnp.int32)[None, :]).astype(jnp.float32)   # (BS, S)

    out_shapes = (
        jax.ShapeDtypeStruct((B, E), jnp.float32),  # weighted
        jax.ShapeDtypeStruct((B, S), jnp.float32),  # weights (lane-dense)
    )

    # Whole problem fits comfortably in VMEM -> single grid step.
    # (For production-sized B one would instead grid over batch tiles with
    #  dimension_semantics=("parallel",) so v7x's second TensorCore is used.)
    weighted, weights = pl.pallas_call(
        attention_kernel,
        out_shape=out_shapes,
        grid=(1,),
        in_specs=[
            pl.BlockSpec((BS, E), lambda i: (0, 0)),
            pl.BlockSpec((B, H), lambda i: (0, 0)),
            pl.BlockSpec((B, S), lambda i: (0, 0)),
            pl.BlockSpec((E, H), lambda i: (0, 0)),
            pl.BlockSpec((H, H), lambda i: (0, 0)),
            pl.BlockSpec((1, H), lambda i: (0, 0)),
            pl.BlockSpec((1, H), lambda i: (0, 0)),
            pl.BlockSpec((B, BS), lambda i: (0, 0)),
            pl.BlockSpec((BS, B), lambda i: (0, 0)),
            pl.BlockSpec((BS, S), lambda i: (0, 0)),
        ],
        out_specs=(
            pl.BlockSpec((B, E), lambda i: (0, 0)),
            pl.BlockSpec((B, S), lambda i: (0, 0)),
        ),
        compiler_params=pltpu.CompilerParams(
            dimension_semantics=("arbitrary",)),
    )(enc_flat, hid_last, mask_i32, we, wh, mb, v_row,
      sel_bbs, sel_bsb, eye_bss)

    # PyTorch convention: weighted (B, 1, E), weights (B, 1, S).
    return weighted[:, None, :], weights[:, None, :]


def attention_reference(hidden, encoder_outputs, mask,
                        M_weight, M_bias, V_weight, V_bias):
    """Pure-JAX reference mirroring the PyTorch forward (keeps V bias)."""
    B, S, E = encoder_outputs.shape
    H = M_weight.shape[0]
    hid = hidden[:, -1, :][:, None, :]                                  # (B, 1, H)
    hid = jnp.broadcast_to(hid, (B, S, H))
    concat = jnp.concatenate([encoder_outputs, hid], axis=2)            # (B, S, E+H)
    m = concat @ M_weight.T + M_bias                                    # (B, S, H)
    scores = (jnp.tanh(m) @ V_weight.T)[..., 0] + V_bias[0]             # (B, S)
    scores = jnp.where(mask, NEG_INF, scores)
    weights = jax.nn.softmax(scores, axis=1)[:, None, :]                # (B, 1, S)
    weighted = jnp.einsum('bos,bse->boe', weights, encoder_outputs)     # (B, 1, E)
    return weighted, weights


if __name__ == "__main__":
    B, L, S = 2, 2, 8
    E = 16   # encoder_outputs_size
    H = 32   # hidden_size

    key = jax.random.PRNGKey(0)
    k_h, k_e, k_mw, k_mb, k_vw, k_vb = jax.random.split(key, 6)

    hidden = jax.random.normal(k_h, (B, L, H), dtype=jnp.float32)
    encoder_outputs = jax.random.normal(k_e, (B, S, E), dtype=jnp.float32)
    # Mask out trailing positions (True = padded / masked).
    lengths = jnp.array([S, S - 3])
    mask = jnp.arange(S)[None, :] >= lengths[:, None]                   # (B, S) bool

    # nn.Linear(E + H, H): weight (H, E+H), bias (H,); nn.Linear(H, 1): weight (1, H), bias (1,)
    bound_m = 1.0 / jnp.sqrt(E + H)
    M_weight = jax.random.uniform(k_mw, (H, E + H), jnp.float32, -bound_m, bound_m)
    M_bias = jax.random.uniform(k_mb, (H,), jnp.float32, -bound_m, bound_m)
    bound_v = 1.0 / jnp.sqrt(H)
    V_weight = jax.random.uniform(k_vw, (1, H), jnp.float32, -bound_v, bound_v)
    V_bias = jax.random.uniform(k_vb, (1,), jnp.float32, -bound_v, bound_v)

    # Split/transpose params for the kernel.
    we = M_weight[:, :E].T                 # (E, H)
    wh = M_weight[:, E:].T                 # (H, H)
    mb = M_bias.reshape(1, H)              # (1, H)
    v_row = V_weight                       # (1, H)
    # V_bias is intentionally NOT given to the kernel: a uniform score shift
    # cancels exactly in softmax; the reference below keeps it and must match.

    weighted, weights = attention_pallas(hidden, encoder_outputs, mask,
                                         we, wh, mb, v_row)
    jax.block_until_ready((weighted, weights))

    ref_weighted, ref_weights = attention_reference(hidden, encoder_outputs, mask,
                                                    M_weight, M_bias,
                                                    V_weight, V_bias)
    assert weighted.shape == (B, 1, E) and weights.shape == (B, 1, S)
    assert jnp.allclose(weights, ref_weights, atol=2e-5, rtol=2e-5)
    assert jnp.allclose(weighted, ref_weighted, atol=2e-5, rtol=2e-5)

    print("KERNEL_OK")
</pallas_src>

<mosaic_0001>
module attributes {stable_mosaic.version = 11 : i64} {
  func.func @attention_kernel(%arg0: i32, %arg1: memref<16x16xf32, #tpu.memory_space<vmem>>, %arg2: memref<2x32xf32, #tpu.memory_space<vmem>>, %arg3: memref<2x8xi32, #tpu.memory_space<vmem>>, %arg4: memref<16x32xf32, #tpu.memory_space<vmem>>, %arg5: memref<32x32xf32, #tpu.memory_space<vmem>>, %arg6: memref<1x32xf32, #tpu.memory_space<vmem>>, %arg7: memref<1x32xf32, #tpu.memory_space<vmem>>, %arg8: memref<2x16xf32, #tpu.memory_space<vmem>>, %arg9: memref<16x2xf32, #tpu.memory_space<vmem>>, %arg10: memref<16x8xf32, #tpu.memory_space<vmem>>, %arg11: memref<2x16xf32, #tpu.memory_space<vmem>>, %arg12: memref<2x8xf32, #tpu.memory_space<vmem>>) attributes {dimension_semantics = [#tpu.dimension_semantics<arbitrary>], iteration_bounds = array<i64: 1>, scalar_prefetch = 0 : i64, scratch_operands = 0 : i64, tpu.core_type = #tpu.core_type<tc>, window_params = [{pipeline_mode = #tpu.pipeline_mode<synchronous>, transform_indices = @transform_0, window_bounds = array<i64: 16, 16>}, {pipeline_mode = #tpu.pipeline_mode<synchronous>, transform_indices = @transform_1, window_bounds = array<i64: 2, 32>}, {pipeline_mode = #tpu.pipeline_mode<synchronous>, transform_indices = @transform_2, window_bounds = array<i64: 2, 8>}, {pipeline_mode = #tpu.pipeline_mode<synchronous>, transform_indices = @transform_3, window_bounds = array<i64: 16, 32>}, {pipeline_mode = #tpu.pipeline_mode<synchronous>, transform_indices = @transform_4, window_bounds = array<i64: 32, 32>}, {pipeline_mode = #tpu.pipeline_mode<synchronous>, transform_indices = @transform_5, window_bounds = array<i64: 1, 32>}, {pipeline_mode = #tpu.pipeline_mode<synchronous>, transform_indices = @transform_6, window_bounds = array<i64: 1, 32>}, {pipeline_mode = #tpu.pipeline_mode<synchronous>, transform_indices = @transform_7, window_bounds = array<i64: 2, 16>}, {pipeline_mode = #tpu.pipeline_mode<synchronous>, transform_indices = @transform_8, window_bounds = array<i64: 16, 2>}, {pipeline_mode = #tpu.pipeline_mode<synchronous>, transform_indices = @transform_9, window_bounds = array<i64: 16, 8>}, {pipeline_mode = #tpu.pipeline_mode<synchronous>, transform_indices = @transform_10, window_bounds = array<i64: 2, 16>}, {pipeline_mode = #tpu.pipeline_mode<synchronous>, transform_indices = @transform_11, window_bounds = array<i64: 2, 8>}]} {
    %c0 = arith.constant 0 : index
    %c0_0 = arith.constant 0 : index
    %0 = vector.load %arg1[%c0, %c0_0] : memref<16x16xf32, #tpu.memory_space<vmem>>, vector<16x16xf32>
    %c0_1 = arith.constant 0 : index
    %c0_2 = arith.constant 0 : index
    %1 = vector.load %arg8[%c0_1, %c0_2] : memref<2x16xf32, #tpu.memory_space<vmem>>, vector<2x16xf32>
    %c0_3 = arith.constant 0 : index
    %c0_4 = arith.constant 0 : index
    %2 = vector.load %arg2[%c0_3, %c0_4] : memref<2x32xf32, #tpu.memory_space<vmem>>, vector<2x32xf32>
    %c0_5 = arith.constant 0 : index
    %c0_6 = arith.constant 0 : index
    %3 = vector.load %arg5[%c0_5, %c0_6] : memref<32x32xf32, #tpu.memory_space<vmem>>, vector<32x32xf32>
    %cst = arith.constant dense<0.000000e+00> : vector<2x32xf32>
    %4 = tpu.matmul %2, %3, %cst {dimension_numbers = #tpu.dot_dimension_numbers<[1], [0], [0], [1], [0, 0, 1, 1], [], []>} : vector<2x32xf32>, vector<32x32xf32>, vector<2x32xf32> -> vector<2x32xf32>
    %c0_7 = arith.constant 0 : index
    %c0_8 = arith.constant 0 : index
    %5 = vector.load %arg6[%c0_7, %c0_8] : memref<1x32xf32, #tpu.memory_space<vmem>>, vector<1x32xf32>
    %6 = vector.broadcast %5 : vector<1x32xf32> to vector<2x32xf32>
    %7 = arith.addf %4, %6 : vector<2x32xf32>
    %c0_9 = arith.constant 0 : index
    %c0_10 = arith.constant 0 : index
    %8 = vector.load %arg9[%c0_9, %c0_10] : memref<16x2xf32, #tpu.memory_space<vmem>>, vector<16x2xf32>
    %cst_11 = arith.constant dense<0.000000e+00> : vector<16x32xf32>
    %9 = tpu.matmul %8, %7, %cst_11 {dimension_numbers = #tpu.dot_dimension_numbers<[1], [0], [0], [1], [0, 0, 1, 1], [], []>} : vector<16x2xf32>, vector<2x32xf32>, vector<16x32xf32> -> vector<16x32xf32>
    %c0_12 = arith.constant 0 : index
    %c0_13 = arith.constant 0 : index
    %10 = vector.load %arg4[%c0_12, %c0_13] : memref<16x32xf32, #tpu.memory_space<vmem>>, vector<16x32xf32>
    %cst_14 = arith.constant dense<0.000000e+00> : vector<16x32xf32>
    %11 = tpu.matmul %0, %10, %cst_14 {dimension_numbers = #tpu.dot_dimension_numbers<[1], [0], [0], [1], [0, 0, 1, 1], [], []>} : vector<16x16xf32>, vector<16x32xf32>, vector<16x32xf32> -> vector<16x32xf32>
    %12 = arith.addf %11, %9 : vector<16x32xf32>
    %13 = math.tanh %12 : vector<16x32xf32>
    %c0_15 = arith.constant 0 : index
    %c0_16 = arith.constant 0 : index
    %14 = vector.load %arg7[%c0_15, %c0_16] : memref<1x32xf32, #tpu.memory_space<vmem>>, vector<1x32xf32>
    %15 = vector.broadcast %14 : vector<1x32xf32> to vector<16x32xf32>
    %16 = arith.mulf %13, %15 : vector<16x32xf32>
    %cst_17 = arith.constant dense<0.000000e+00> : vector<16xf32>
    %17 = vector.multi_reduction <add>, %16, %cst_17 [1] : vector<16x32xf32> to vector<16xf32>
    %18 = vector.shape_cast %17 : vector<16xf32> to vector<16x1xf32>
    %c0_18 = arith.constant 0 : index
    %c0_19 = arith.constant 0 : index
    %19 = vector.load %arg10[%c0_18, %c0_19] : memref<16x8xf32, #tpu.memory_space<vmem>>, vector<16x8xf32>
    %20 = vector.broadcast %18 : vector<16x1xf32> to vector<16x8xf32>
    %21 = arith.mulf %20, %19 : vector<16x8xf32>
    %cst_20 = arith.constant dense<0.000000e+00> : vector<2x8xf32>
    %22 = tpu.matmul %1, %21, %cst_20 {dimension_numbers = #tpu.dot_dimension_numbers<[1], [0], [0], [1], [0, 0, 1, 1], [], []>} : vector<2x16xf32>, vector<16x8xf32>, vector<2x8xf32> -> vector<2x8xf32>
    %c0_21 = arith.constant 0 : index
    %c0_22 = arith.constant 0 : index
    %23 = vector.load %arg3[%c0_21, %c0_22] : memref<2x8xi32, #tpu.memory_space<vmem>>, vector<2x8xi32>
    %c0_i32 = arith.constant 0 : i32
    %24 = vector.broadcast %c0_i32 : i32 to vector<2x8xi32>
    %25 = arith.cmpi ne, %23, %24 : vector<2x8xi32>
    %cst_23 = arith.constant 0xFF800000 : f32
    %26 = vector.broadcast %cst_23 : f32 to vector<2x8xf32>
    %27 = arith.select %25, %26, %22 : vector<2x8xi1>, vector<2x8xf32>
    %cst_24 = arith.constant dense<0xFF800000> : vector<2xf32>
    %28 = vector.multi_reduction <maximumf>, %27, %cst_24 [1] : vector<2x8xf32> to vector<2xf32>
    %29 = vector.shape_cast %28 : vector<2xf32> to vector<2x1xf32>
    %30 = vector.broadcast %29 : vector<2x1xf32> to vector<2x8xf32>
    %31 = arith.subf %27, %30 : vector<2x8xf32>
    %32 = math.exp %31 : vector<2x8xf32>
    %cst_25 = arith.constant dense<0.000000e+00> : vector<2xf32>
    %33 = vector.multi_reduction <add>, %32, %cst_25 [1] : vector<2x8xf32> to vector<2xf32>
    %34 = vector.shape_cast %33 : vector<2xf32> to vector<2x1xf32>
    %35 = tpu.reciprocal %34 {approx = true} : vector<2x1xf32> -> vector<2x1xf32>
    %36 = arith.mulf %34, %35 : vector<2x1xf32>
    %cst_26 = arith.constant 2.000000e+00 : f32
    %37 = vector.broadcast %cst_26 : f32 to vector<2x1xf32>
    %38 = arith.subf %37, %36 : vector<2x1xf32>
    %39 = arith.mulf %35, %38 : vector<2x1xf32>
    %40 = vector.broadcast %39 : vector<2x1xf32> to vector<2x8xf32>
    %41 = arith.mulf %32, %40 : vector<2x8xf32>
    %42 = tpu.concatenate %41, %41 in 1 : vector<2x8xf32>, vector<2x8xf32> -> vector<2x16xf32>
    %43 = arith.mulf %42, %1 : vector<2x16xf32>
    %cst_27 = arith.constant dense<0.000000e+00> : vector<2x16xf32>
    %44 = tpu.matmul %43, %0, %cst_27 {dimension_numbers = #tpu.dot_dimension_numbers<[1], [0], [0], [1], [0, 0, 1, 1], [], []>} : vector<2x16xf32>, vector<16x16xf32>, vector<2x16xf32> -> vector<2x16xf32>
    %c0_28 = arith.constant 0 : index
    %c0_29 = arith.constant 0 : index
    %45 = vector.load %arg12[%c0_28, %c0_29] : memref<2x8xf32, #tpu.memory_space<vmem>>, vector<2x8xf32>
    tpu.vector_store %arg12[%c0_28, %c0_29], %41 {strides = array<i32>} : memref<2x8xf32, #tpu.memory_space<vmem>>, vector<2x8xf32>,
    %c0_30 = arith.constant 0 : index
    %c0_31 = arith.constant 0 : index
    %46 = vector.load %arg11[%c0_30, %c0_31] : memref<2x16xf32, #tpu.memory_space<vmem>>, vector<2x16xf32>
    tpu.vector_store %arg11[%c0_30, %c0_31], %44 {strides = array<i32>} : memref<2x16xf32, #tpu.memory_space<vmem>>, vector<2x16xf32>,
    return
  }
  func.func @transform_0(%arg0: i32) -> (i32, i32) {
    %c0_i32 = arith.constant 0 : i32
    %c0_i32_0 = arith.constant 0 : i32
    %c0_i32_1 = arith.constant 0 : i32
    return %c0_i32, %c0_i32_0 : i32, i32
  }
  func.func @transform_1(%arg0: i32) -> (i32, i32) {
    %c0_i32 = arith.constant 0 : i32
    %c0_i32_0 = arith.constant 0 : i32
    %c0_i32_1 = arith.constant 0 : i32
    return %c0_i32, %c0_i32_0 : i32, i32
  }
  func.func @transform_2(%arg0: i32) -> (i32, i32) {
    %c0_i32 = arith.constant 0 : i32
    %c0_i32_0 = arith.constant 0 : i32
    %c0_i32_1 = arith.constant 0 : i32
    return %c0_i32, %c0_i32_0 : i32, i32
  }
  func.func @transform_3(%arg0: i32) -> (i32, i32) {
    %c0_i32 = arith.constant 0 : i32
    %c0_i32_0 = arith.constant 0 : i32
    %c0_i32_1 = arith.constant 0 : i32
    return %c0_i32, %c0_i32_0 : i32, i32
  }
  func.func @transform_4(%arg0: i32) -> (i32, i32) {
    %c0_i32 = arith.constant 0 : i32
    %c0_i32_0 = arith.constant 0 : i32
    %c0_i32_1 = arith.constant 0 : i32
    return %c0_i32, %c0_i32_0 : i32, i32
  }
  func.func @transform_5(%arg0: i32) -> (i32, i32) {
    %c0_i32 = arith.constant 0 : i32
    %c0_i32_0 = arith.constant 0 : i32
    %c0_i32_1 = arith.constant 0 : i32
    return %c0_i32, %c0_i32_0 : i32, i32
  }
  func.func @transform_6(%arg0: i32) -> (i32, i32) {
    %c0_i32 = arith.constant 0 : i32
    %c0_i32_0 = arith.constant 0 : i32
    %c0_i32_1 = arith.constant 0 : i32
    return %c0_i32, %c0_i32_0 : i32, i32
  }
  func.func @transform_7(%arg0: i32) -> (i32, i32) {
    %c0_i32 = arith.constant 0 : i32
    %c0_i32_0 = arith.constant 0 : i32
    %c0_i32_1 = arith.constant 0 : i32
    return %c0_i32, %c0_i32_0 : i32, i32
  }
  func.func @transform_8(%arg0: i32) -> (i32, i32) {
    %c0_i32 = arith.constant 0 : i32
    %c0_i32_0 = arith.constant 0 : i32
    %c0_i32_1 = arith.constant 0 : i32
    return %c0_i32, %c0_i32_0 : i32, i32
  }
  func.func @transform_9(%arg0: i32) -> (i32, i32) {
    %c0_i32 = arith.constant 0 : i32
    %c0_i32_0 = arith.constant 0 : i32
    %c0_i32_1 = arith.constant 0 : i32
    return %c0_i32, %c0_i32_0 : i32, i32
  }
  func.func @transform_10(%arg0: i32) -> (i32, i32) {
    %c0_i32 = arith.constant 0 : i32
    %c0_i32_0 = arith.constant 0 : i32
    %c0_i32_1 = arith.constant 0 : i32
    return %c0_i32, %c0_i32_0 : i32, i32
  }
  func.func @transform_11(%arg0: i32) -> (i32, i32) {
    %c0_i32 = arith.constant 0 : i32
    %c0_i32_0 = arith.constant 0 : i32
    %c0_i32_1 = arith.constant 0 : i32
    return %c0_i32, %c0_i32_0 : i32, i32
  }
}

</mosaic_0001>

<llo_original>
// kernel: eq.22
$region0: #{eq.22}
  %s0 = inlined_call_operand.vmem [shape: s32[2,8], index: 0, kind: input, shape index: {}]
  %s1 = inlined_call_operand.vmem [shape: s32[16], index: 1, kind: output, shape index: {}]
  $region1: #{eq.22} parent=0
    #allocation0 [shape = 'u8[4096]{0}', space=vmem, size = 0x1000, scoped, tag = 'scoped mem for output reshape']
    #allocation1 [shape = 'u8[4096]{0}', space=vmem, size = 0x1000, scoped, tag = 'scoped mem for input reshape']
    %s3 = ssub.s32 4, 1
    %v4 = vld [vmem:[%s0] sm:%s3]
    %5 = vst [vmem:[#allocation1] sm:%s3] %v4
    %v6 = vld [vmem:[#allocation1] sm:$0x1]
    %vm7 = vcmask 64512
    %8 = vst.msk [vmem:[#allocation0] sm:$0x1] %vm7, %v6
    %s9 = scalar_lea.vmem [#allocation1], 1
    %v10 = vld [vmem:[%s9] sm:$0x1]
    %11 = vrot.lane.b32.xlu0 %v10, 8
    %v12 = vpop.permute.xlu0 %11
    %vm13 = vcmask 130112
    %14 = vst.msk [vmem:[#allocation0] sm:$0x1] %vm13, %v12
    %s16 = ssub.s32 2, 1
    %v17 = vld [vmem:[#allocation0] sm:%s16]
    %s19 = ssub.s32 2, 1
    %20 = vst [vmem:[%s1] sm:%s19] %v17

// kernel: attention_pallas.1
$region0: #{attention_pallas.1}
  #allocation0 [shape = 'u32[]', space=smem, size = 0x4, offset = 0x4, fixed_abs, tag = 'smem constant byte address 0x4 - core index']
  #allocation1 [shape = 'u32[72,128]{1,0:T(1,128)}', space=vmem, size = 0x9000, scoped, tag = 'internal scratch']
  %s0 = inlined_call_operand.vmem [shape: f32[16,16], index: 0, kind: input, shape index: {}]
  %s1 = inlined_call_operand.vmem [shape: f32[2,32], index: 1, kind: input, shape index: {}]
  %s2 = inlined_call_operand.vmem [shape: s32[2,8], index: 2, kind: input, shape index: {}]
  %s3 = inlined_call_operand.hbm [shape: f32[16,32], index: 3, kind: input, shape index: {}]
  %s4 = inlined_call_operand.vmem [shape: f32[32,32], index: 4, kind: input, shape index: {}]
  %s5 = inlined_call_operand.vmem [shape: f32[1,32], index: 5, kind: input, shape index: {}]
  %s6 = inlined_call_operand.vmem [shape: f32[1,32], index: 6, kind: input, shape index: {}]
  %s7 = inlined_call_operand.vmem [shape: f32[2,16], index: 7, kind: input, shape index: {}]
  %s8 = inlined_call_operand.vmem [shape: f32[16,2], index: 8, kind: input, shape index: {}]
  %s9 = inlined_call_operand.vmem [shape: f32[16,8], index: 9, kind: input, shape index: {}]
  %s10 = inlined_call_operand.hbm [shape: f32[2,16], index: 10, kind: output, shape index: {0}]
  %s11 = inlined_call_operand.hbm [shape: f32[2,8], index: 11, kind: output, shape index: {1}]
  %12 = xla_tuple %s10, %s11
  %s13 = sld [smem:[#allocation0]]
  $region62: #{attention_pallas.1} parent=0
    _
  %s15 = ssub.s32 1, %s13
  %s16 = scalar_select 0, %s15, %s13
  $region1: #{attention_pallas.1} parent=0
    #allocation2 [shape = 'u8[8192]{0}', space=vmem, size = 0x2000, scoped, tag = 'input window, operand 3, single buffered']
    #allocation3 [shape = 's32[1]{0}', space=sflag, size = 0x4, scoped, tag = 'scoped memory for attention_pallas.1']
    #allocation4 [shape = 's32[1]{0}', space=sflag, size = 0x4, scoped, tag = 'scoped memory for attention_pallas.1']
    #allocation5 [shape = 'u8[1024]{0}', space=vmem, size = 0x400, scoped, tag = 'output window, operand 0, single buffered']
    #allocation6 [shape = 'u8[1024]{0}', space=vmem, size = 0x400, scoped, tag = 'output window, operand 1, single buffered']
    #allocation7 [shape = 's32[1]{0}', space=sflag, size = 0x4, scoped, tag = 'scoped memory for attention_pallas.1']
    %17 = vsyncpa [#allocation3], 0
    %18 = vsyncpa [#allocation4], 0
    %19 = vsyncpa [#allocation7], 0
    // Predicated region
    $region2: #{attention_pallas.1} parent=1 // pred_check
      _
    $region3: #{attention_pallas.1} parent=1 // pred_check_branch
      %21 = sbr.rel (0) target = $region5
    $region4: #{attention_pallas.1} parent=1 // pred_region
      _
    $region5: #{attention_pallas.1} parent=1 // pred_fallthru
      _
    // Predicated region
    $region6: #{attention_pallas.1} parent=1 // pred_check
      _
    $region7: #{attention_pallas.1} parent=1 // pred_check_branch
      %23 = sbr.rel (0) target = $region9
    $region8: #{attention_pallas.1} parent=1 // pred_region
      _
    $region9: #{attention_pallas.1} parent=1 // pred_fallthru
      _
    // Predicated region
    $region10: #{attention_pallas.1} parent=1 // pred_check
      _
    $region11: #{attention_pallas.1} parent=1 // pred_check_branch
      %25 = sbr.rel (0) target = $region13
    $region12: #{attention_pallas.1} parent=1 // pred_region
      _
    $region13: #{attention_pallas.1} parent=1 // pred_fallthru
      _
    // Predicated region
    $region14: #{attention_pallas.1} parent=1 // pred_check
      _
    $region15: #{attention_pallas.1} parent=1 // pred_check_branch
      %27 = sbr.rel (0) target = $region17
    $region16: #{attention_pallas.1} parent=1 // pred_region
      %29 = vsyncadd [#allocation3], 0
      %s30 = sshll.u32 %s3, 4
      %s31 = int_to_ptr.hbm [resolvable:$true] %s30
      %s32 = sshll.u32 [#allocation2], 4
      %s33 = int_to_ptr.vmem [resolvable:$true] %s32
      %38 = dma.hbm_to_vmem [thread:$0]  %s31, 256, %s33, [#allocation3], 128, 128, 8
    $region17: #{attention_pallas.1} parent=1 // pred_fallthru
      _
    // Predicated region
    $region18: #{attention_pallas.1} parent=1 // pred_check
      _
    $region19: #{attention_pallas.1} parent=1 // pred_check_branch
      %40 = sbr.rel (0) target = $region21
    $region20: #{attention_pallas.1} parent=1 // pred_region
      _
    $region21: #{attention_pallas.1} parent=1 // pred_fallthru
      _
    // Predicated region
    $region22: #{attention_pallas.1} parent=1 // pred_check
      _
    $region23: #{attention_pallas.1} parent=1 // pred_check_branch
      %42 = sbr.rel (0) target = $region25
    $region24: #{attention_pallas.1} parent=1 // pred_region
      _
    $region25: #{attention_pallas.1} parent=1 // pred_fallthru
      _
    // Predicated region
    $region26: #{attention_pallas.1} parent=1 // pred_check
      _
    $region27: #{attention_pallas.1} parent=1 // pred_check_branch
      %44 = sbr.rel (0) target = $region29
    $region28: #{attention_pallas.1} parent=1 // pred_region
      _
    $region29: #{attention_pallas.1} parent=1 // pred_fallthru
      _
    // Predicated region
    $region30: #{attention_pallas.1} parent=1 // pred_check
      _
    $region31: #{attention_pallas.1} parent=1 // pred_check_branch
      %46 = sbr.rel (0) target = $region33
    $region32: #{attention_pallas.1} parent=1 // pred_region
      _
    $region33: #{attention_pallas.1} parent=1 // pred_fallthru
      _
    // Predicated region
    $region34: #{attention_pallas.1} parent=1 // pred_check
      _
    $region35: #{attention_pallas.1} parent=1 // pred_check_branch
      %48 = sbr.rel (0) target = $region37
    $region36: #{attention_pallas.1} parent=1 // pred_region
      _
    $region37: #{attention_pallas.1} parent=1 // pred_fallthru
      _
    // Predicated region
    $region38: #{attention_pallas.1} parent=1 // pred_check
      _
    $region39: #{attention_pallas.1} parent=1 // pred_check_branch
      %50 = sbr.rel (0) target = $region41
    $region40: #{attention_pallas.1} parent=1 // pred_region
      _
    $region41: #{attention_pallas.1} parent=1 // pred_fallthru
      _
    // Predicated region
    $region42: #{attention_pallas.1} parent=1 // pred_check
      _
    $region43: #{attention_pallas.1} parent=1 // pred_check_branch
      %52 = sbr.rel (0) target = $region45
    $region44: #{attention_pallas.1} parent=1 // pred_region
      %54 = dma.done [#allocation3], 256
    $region45: #{attention_pallas.1} parent=1 // pred_fallthru
      _
    %v55 = vld [vmem:[%s0] sm:$0xff]
    %v56 = vld [vmem:[%s0 + $0x8] sm:$0xff]
    %v57 = vld [vmem:[%s7] sm:$0x3]
    %v58 = vld [vmem:[%s1] sm:$0x3]
    %v59 = vld [vmem:[%s4] sm:$0xff]
    %v60 = vld [vmem:[%s4 + $0x8] sm:$0xff]
    %v61 = vld [vmem:[%s4 + $0x10] sm:$0xff]
    %v62 = vld [vmem:[%s4 + $0x18] sm:$0xff]
    %v63 = vld [vmem:[%s5] sm:$0x1]
    %v65 = vperm.slane %v63, 0
    %vm67 = vcmask 261120
    %v69 = vsel %vm67, %v58, 0
    %71 = vmatpush.msra.mxu0 0.0
    %72 = vmatpush.msra.mxu0 0.0
    %73 = vmatpush.msra.mxu0 0.0
    %74 = vmatpush.msra.mxu0 0.0
    %75 = vmatpush.msra.mxu0 0.0
    %76 = vmatpush.msra.mxu0 0.0
    %77 = vmatpush.msra.mxu0 0.0
    %78 = vmatpush.msra.mxu0 0.0
    %79 = vmatpush.msra.mxu0 0.0
    %80 = vmatpush.msra.mxu0 0.0
    %81 = vmatpush.msra.mxu0 0.0
    %82 = vmatpush.msra.mxu0 0.0
    %83 = vmatpush.msra.mxu0 %v62
    %84 = vmatpush.msra.mxu0 %v61
    %85 = vmatpush.msra.mxu0 %v60
    %86 = vmatpush.msra.mxu0 %v59
    %87 = vmatmul.f32.gmra.mxu0 %v69
    %v88 = vpop.f32.mrf.mxu0
    %v89 = vadd.f32 %v65, %v88
    %90 = vdwg.mxu0
    %v91 = vld [vmem:[%s8] sm:$0xff]
    %v92 = vld [vmem:[%s8 + $0x8] sm:$0xff]
    %vm93 = vcmask 15360
    %v95 = vsel %vm93, %v91, 0
    %v98 = vsel %vm93, %v92, 0
    %vm100 = vcmask 1041408
    %v102 = vsel %vm100, %v89, 0
    %104 = vmatpush.msra.mxu0 0.0
    %105 = vmatpush.msra.mxu0 0.0
    %106 = vmatpush.msra.mxu0 0.0
    %107 = vmatpush.msra.mxu0 0.0
    %108 = vmatpush.msra.mxu0 0.0
    %109 = vmatpush.msra.mxu0 0.0
    %110 = vmatpush.msra.mxu0 0.0
    %111 = vmatpush.msra.mxu0 0.0
    %112 = vmatpush.msra.mxu0 0.0
    %113 = vmatpush.msra.mxu0 0.0
    %114 = vmatpush.msra.mxu0 0.0
    %115 = vmatpush.msra.mxu0 0.0
    %116 = vmatpush.msra.mxu0 0.0
    %117 = vmatpush.msra.mxu0 0.0
    %118 = vmatpush.msra.mxu0 0.0
    %119 = vmatpush.msra.mxu0 %v102
    %120 = vmatmul.f32.gmra.mxu0 %v95
    %v121 = vpop.f32.mrf.mxu0
    %v122 = vadd.f32 0.0, %v121
    %123 = vmatmul.f32.gmra.mxu0 %v98
    %v124 = vpop.f32.mrf.mxu0
    %v125 = vadd.f32 0.0, %v124
    %126 = vdwg.mxu0
    %v127 = vld [vmem:[#allocation2] sm:$0xff]
    %v128 = vld [vmem:[#allocation2 + $0x8] sm:$0xff]
    %vm129 = vcmask 130048
    %v131 = vsel %vm129, %v55, 0
    %v134 = vsel %vm129, %v56, 0
    %136 = vmatpush.msra.mxu0 0.0
    %137 = vmatpush.msra.mxu0 0.0
    %138 = vmatpush.msra.mxu0 0.0
    %139 = vmatpush.msra.mxu0 0.0
    %140 = vmatpush.msra.mxu0 0.0
    %141 = vmatpush.msra.mxu0 0.0
    %142 = vmatpush.msra.mxu0 0.0
    %143 = vmatpush.msra.mxu0 0.0
    %144 = vmatpush.msra.mxu0 0.0
    %145 = vmatpush.msra.mxu0 0.0
    %146 = vmatpush.msra.mxu0 0.0
    %147 = vmatpush.msra.mxu0 0.0
    %148 = vmatpush.msra.mxu0 0.0
    %149 = vmatpush.msra.mxu0 0.0
    %150 = vmatpush.msra.mxu0 %v128
    %151 = vmatpush.msra.mxu0 %v127
    %152 = vmatmul.f32.gmra.mxu0 %v131
    %v153 = vpop.f32.mrf.mxu0
    %v154 = vadd.f32 %v122, %v153
    %155 = vmatmul.f32.gmra.mxu0 %v134
    %v156 = vpop.f32.mrf.mxu0
    %v157 = vadd.f32 %v125, %v156
    %158 = vdwg.mxu0
    %v159 = vtanh.pop %v154
    %v160 = vtanh.pop %v157
    %v161 = vld [vmem:[%s6] sm:$0x1]
    %v163 = vperm.slane %v161, 0
    %v165 = vmul.f32 %v159, %v163
    %v166 = vmul.f32 %v160, %v163
    %v167 = vsel %vm67, %v165, 0.0
    %168 = vadd.xlane.f32.xlu0 %v167
    %v169 = vpop.xlane.xlu0 %168
    %v170 = vsel %vm67, %v166, 0.0
    %171 = vadd.xlane.f32.xlu0 %v170
    %v172 = vpop.xlane.xlu0 %171
    %v173 = vld [vmem:[%s9] sm:$0xff]
    %v174 = vld [vmem:[%s9 + $0x8] sm:$0xff]
    %v175 = vmul.f32 %v169, %v173
    %v176 = vmul.f32 %v172, %v174
    %v178 = vsel %vm129, %v57, 0
    %180 = vmatpush.msra.mxu0 0.0
    %181 = vmatpush.msra.mxu0 0.0
    %182 = vmatpush.msra.mxu0 0.0
    %183 = vmatpush.msra.mxu0 0.0
    %184 = vmatpush.msra.mxu0 0.0
    %185 = vmatpush.msra.mxu0 0.0
    %186 = vmatpush.msra.mxu0 0.0
    %187 = vmatpush.msra.mxu0 0.0
    %188 = vmatpush.msra.mxu0 0.0
    %189 = vmatpush.msra.mxu0 0.0
    %190 = vmatpush.msra.mxu0 0.0
    %191 = vmatpush.msra.mxu0 0.0
    %192 = vmatpush.msra.mxu0 0.0
    %193 = vmatpush.msra.mxu0 0.0
    %194 = vmatpush.msra.mxu0 %v176
    %195 = vmatpush.msra.mxu0 %v175
    %196 = vmatmul.f32.gmra.mxu0 %v178
    %v197 = vpop.f32.mrf.mxu0
    %v198 = vadd.f32 0.0, %v197
    %199 = vdwg.mxu0
    %v200 = vld [vmem:[%s2] sm:$0x3]
    %vm201 = vcmp.ne.s32.totalorder %v200, 0
    %v202 = vsel %vm201, -inf, %v198
    %vm203 = vcmask 58368
    %v204 = vsel %vm203, %v202, -inf
    %205 = vmax.xlane.f32.xlu0 %v204
    %v206 = vpop.xlane.xlu0 %205
    %v207 = vsub.f32 %v202, %v206
    %v208 = vmul.f32 %v207, 1.442695
    %v209 = vpow.pop %v208
    %v210 = vsel %vm203, %v209, 0.0
    %211 = vadd.xlane.f32.xlu0 %v210
    %v212 = vpop.xlane.xlu0 %211
    %v213 = vrcp.pop %v212
    %v214 = vmul.f32 %v212, %v213
    %v215 = vsub.f32 2.0, %v214
    %v216 = vmul.f32 %v213, %v215
    %v217 = vmul.f32 %v209, %v216
    %219 = vrot.lane.b32.xlu0 %v217, 8
    %v220 = vpop.permute.xlu0 %219
    %vm222 = vcmask 64512
    %v223 = vsel %vm222, %v217, %v220
    %v224 = vmul.f32 %v223, %v57
    %v226 = vsel %vm129, %v224, 0
    %228 = vmatpush.msra.mxu0 0.0
    %229 = vmatpush.msra.mxu0 0.0
    %230 = vmatpush.msra.mxu0 0.0
    %231 = vmatpush.msra.mxu0 0.0
    %232 = vmatpush.msra.mxu0 0.0
    %233 = vmatpush.msra.mxu0 0.0
    %234 = vmatpush.msra.mxu0 0.0
    %235 = vmatpush.msra.mxu0 0.0
    %236 = vmatpush.msra.mxu0 0.0
    %237 = vmatpush.msra.mxu0 0.0
    %238 = vmatpush.msra.mxu0 0.0
    %239 = vmatpush.msra.mxu0 0.0
    %240 = vmatpush.msra.mxu0 0.0
    %241 = vmatpush.msra.mxu0 0.0
    %242 = vmatpush.msra.mxu0 %v56
    %243 = vmatpush.msra.mxu0 %v55
    %244 = vmatmul.f32.gmra.mxu0 %v226
    %v245 = vpop.f32.mrf.mxu0
    %v246 = vadd.f32 0.0, %v245
    %247 = vdwg.mxu0
    %248 = vst.msk [vmem:[#allocation6] sm:$0x3] %vm203, %v217
    %vm249 = vcmask 123904
    %250 = vst.msk [vmem:[#allocation5] sm:$0x3] %vm249, %v246
    // Predicated region
    $region46: #{attention_pallas.1} parent=1 // pred_check
      _
    $region47: #{attention_pallas.1} parent=1 // pred_check_branch
      %252 = sbr.rel (0) target = $region49
    $region48: #{attention_pallas.1} parent=1 // pred_region
      %254 = vsyncadd [#allocation4], 0
      %s256 = sshll.u32 [#allocation5], 4
      %s257 = int_to_ptr.vmem [resolvable:$true] %s256
      %s258 = sshll.u32 %s10, 4
      %s259 = int_to_ptr.hbm [resolvable:$true] %s258
      %261 = dma.vmem_to_hbm [thread:$0]  %s257, 32, %s259, [#allocation4]
    $region49: #{attention_pallas.1} parent=1 // pred_fallthru
      _
    // Predicated region
    $region50: #{attention_pallas.1} parent=1 // pred_check
      _
    $region51: #{attention_pallas.1} parent=1 // pred_check_branch
      %263 = sbr.rel (0) target = $region53
    $region52: #{attention_pallas.1} parent=1 // pred_region
      %265 = vsyncadd [#allocation7], 0
      %s267 = sshll.u32 [#allocation6], 4
      %s268 = int_to_ptr.vmem [resolvable:$true] %s267
      %s269 = sshll.u32 %s11, 4
      %s270 = int_to_ptr.hbm [resolvable:$true] %s269
      %272 = dma.vmem_to_hbm [thread:$0]  %s268, 32, %s270, [#allocation7]
    $region53: #{attention_pallas.1} parent=1 // pred_fallthru
      _
    // Predicated region
    $region54: #{attention_pallas.1} parent=1 // pred_check
      _
    $region55: #{attention_pallas.1} parent=1 // pred_check_branch
      %274 = sbr.rel (0) target = $region57
    $region56: #{attention_pallas.1} parent=1 // pred_region
      %276 = dma.done [#allocation4], 32
    $region57: #{attention_pallas.1} parent=1 // pred_fallthru
      _
    // Predicated region
    $region58: #{attention_pallas.1} parent=1 // pred_check
      _
    $region59: #{attention_pallas.1} parent=1 // pred_check_branch
      %278 = sbr.rel (0) target = $region61
    $region60: #{attention_pallas.1} parent=1 // pred_region
      %280 = dma.done [#allocation7], 32
    $region61: #{attention_pallas.1} parent=1 // pred_fallthru
      _
    %281 = vsyncpa [#allocation3], 1
    %282 = vsyncpa [#allocation4], 1
    %283 = vsyncpa [#allocation7], 1

</llo_original>
